<compile_context>
chip_gen: v7x
topology: tpu7x:2x2x1
jax: 0.10.0
libtpu: 0.0.40
codegen_flags: <defaults>
</compile_context>

<pallas_src>
import functools
import math

import jax
import jax.numpy as jnp
from jax.experimental import pallas as pl
from jax.experimental.pallas import tpu as pltpu


# ---------------------------------------------------------------------------
# Sizing helpers
# ---------------------------------------------------------------------------

def _cdiv(a, b):
    return -(-a // b)


def _round_up(a, b):
    return _cdiv(a, b) * b


def _vmem_capacity_bytes():
    try:
        return int(pltpu.get_tpu_info().vmem_capacity_bytes)
    except Exception:
        return 64 << 20  # conservative fallback: v7x per-TC VMEM


_PHYS_VMEM = _vmem_capacity_bytes()
# Scoped-VMEM limit handed to Mosaic (96 MiB on 128 MiB parts, 48 MiB on v7x);
# tiles are planned against 75% of it so the compiler keeps internal headroom.
_VMEM_LIMIT_BYTES = min((_PHYS_VMEM * 3) // 4, 100 << 20)
_TILE_BUDGET_BYTES = (_VMEM_LIMIT_BYTES * 3) // 4


def _even_grid_adjust(n, blk, align, min_bytes_per_blk, bytes_per_unit):
    """Nudge blk so the step count over n is even (v7x: 2 TCs share the axis).

    Only shrinks the block if the per-step input stays >= min_bytes_per_blk
    (well above the ~1.1 MiB hidden by the ~0.35us/step overhead at v7x HBM BW),
    or if there was only one step to begin with.
    """
    g = _cdiv(n, blk)
    if g % 2 == 0:
        return blk
    blk2 = _round_up(_cdiv(n, g + 1), align)
    if blk2 >= align and _cdiv(n, blk2) % 2 == 0 and (
            g == 1 or blk2 * bytes_per_unit >= min_bytes_per_blk):
        return blk2
    return blk


def _choose_row_block(rows, feats, itemsize):
    # VMEM bytes per tile row, lane-padded (a (rb, feats) buffer occupies
    # round_up(feats, 128) lanes): 2x double-buffered in + 2x out in the I/O
    # dtype, plus ~3 f32 full-tile temporaries for the f32 compute path.
    lanes = _round_up(feats, 128)
    per_row = lanes * (4 * itemsize + 12)
    rb = max(_TILE_BUDGET_BYTES // per_row, 1)
    rb = max(16, (rb // 16) * 16)                 # 16: full sublane group even for bf16
    rb = min(rb, _round_up(rows, 16))             # never exceed the data itself
    return _even_grid_adjust(rows, rb, 16, 2 << 20, feats * itemsize)


def _choose_spatial_block(spatial, feats, itemsize):
    # Channel path: feats sits on sublanes (padded per dtype), spatial on lanes.
    sub_io = _round_up(feats, max(32 // itemsize, 8))
    sub_f32 = _round_up(feats, 8)
    per_col = sub_io * itemsize * 4 + sub_f32 * 4 * 3
    sb = max(_TILE_BUDGET_BYTES // per_col, 1)
    sb = max(128, (sb // 128) * 128)              # lane-dense blocks
    sb = min(sb, _round_up(spatial, 128))
    return _even_grid_adjust(spatial, sb, 128, 2 << 20, feats * itemsize)


# ---------------------------------------------------------------------------
# Kernels
# ---------------------------------------------------------------------------

def _lane_ln_kernel(x_ref, g_ref, o_ref, *, eps, stable, inv_feats):
    """Normalize over the lane (last) axis. x_ref: (rb, feats), g_ref: (1, feats)."""
    x = x_ref[...].astype(jnp.float32)
    if stable:
        # x = x / x.amax(dim, keepdim=True): EUP approx reciprocal; the uniform
        # per-row scale cancels in the normalized output except through eps.
        x = x * pl.reciprocal(jnp.max(x, axis=-1, keepdims=True), approx=True)
    mean = jnp.sum(x, axis=-1, keepdims=True) * inv_feats
    d = x - mean
    # Centered variance (tile is resident): matches torch.var(unbiased=False).
    var = jnp.sum(d * d, axis=-1, keepdims=True) * inv_feats
    inv_std = jax.lax.rsqrt(var + eps)
    o_ref[...] = (d * inv_std * g_ref[...]).astype(o_ref.dtype)


def _chan_ln_kernel(x_ref, g_ref, o_ref, *, eps, stable, inv_feats):
    """Normalize over the sublane (feats) axis. x_ref: (1, C, sblk), g_ref: (1, C, 1)."""
    x = x_ref[...].astype(jnp.float32)
    if stable:
        x = x * pl.reciprocal(jnp.max(x, axis=1, keepdims=True), approx=True)
    mean = jnp.sum(x, axis=1, keepdims=True) * inv_feats
    d = x - mean
    var = jnp.sum(d * d, axis=1, keepdims=True) * inv_feats
    inv_std = jax.lax.rsqrt(var + eps)
    o_ref[...] = (d * inv_std * g_ref[...]).astype(o_ref.dtype)


# ---------------------------------------------------------------------------
# Wrapper
# ---------------------------------------------------------------------------

def layer_norm(x, g, *, dim=-1, stable=False):
    """Pallas LayerNorm matching the PyTorch module's forward semantics.

    x: any shape; normalization is over axis `dim`.
    g: the gain parameter; any shape with x.shape[dim] elements (the PyTorch
       param (feats, 1, ..., 1) can be passed directly).
    """
    dtype = x.dtype
    eps = 1e-05 if dtype == jnp.float32 else 1e-03
    axis = dim % x.ndim
    feats = x.shape[axis]
    itemsize = jnp.dtype(dtype).itemsize
    g_flat = jnp.asarray(g, jnp.float32).reshape(feats)   # keep gain in f32
    kernel_kwargs = dict(eps=eps, stable=stable, inv_feats=1.0 / feats)

    if axis == x.ndim - 1:
        # ----- lane-axis LayerNorm: feats on lanes, rows tiled on sublanes -----
        lead = x.shape[:-1]
        rows = int(math.prod(lead)) if lead else 1
        x2d = x.reshape(rows, feats)                       # contiguous: free
        g2d = g_flat.reshape(1, feats)
        row_block = _choose_row_block(rows, feats, itemsize)
        grid = (_cdiv(rows, row_block),)                   # last block may be partial
        out2d = pl.pallas_call(
            functools.partial(_lane_ln_kernel, **kernel_kwargs),
            out_shape=jax.ShapeDtypeStruct((rows, feats), dtype),
            grid_spec=pltpu.PrefetchScalarGridSpec(
                num_scalar_prefetch=0,
                grid=grid,
                in_specs=[
                    pl.BlockSpec((row_block, feats), lambda i: (i, 0)),
                    pl.BlockSpec((1, feats), lambda i: (0, 0)),
                ],
                out_specs=pl.BlockSpec((row_block, feats), lambda i: (i, 0)),
            ),
            compiler_params=pltpu.CompilerParams(
                dimension_semantics=("parallel",),
                vmem_limit_bytes=_VMEM_LIMIT_BYTES),
        )(x2d, g2d)
        return out2d.reshape(x.shape)

    # ----- channel-axis LayerNorm (dim != -1): feats on sublanes, spatial on lanes ---
    lead = x.shape[:axis]
    trail = x.shape[axis + 1:]
    b = int(math.prod(lead)) if lead else 1
    s = int(math.prod(trail)) if trail else 1
    x3d = x.reshape(b, feats, s)                           # contiguous: free
    g3d = g_flat.reshape(1, feats, 1)
    sblk = _choose_spatial_block(s, feats, itemsize)
    grid = (b, _cdiv(s, sblk))
    out3d = pl.pallas_call(
        functools.partial(_chan_ln_kernel, **kernel_kwargs),
        out_shape=jax.ShapeDtypeStruct((b, feats, s), dtype),
        grid_spec=pltpu.PrefetchScalarGridSpec(
            num_scalar_prefetch=0,
            grid=grid,
            in_specs=[
                pl.BlockSpec((1, feats, sblk), lambda bi, si: (bi, 0, si)),
                pl.BlockSpec((1, feats, 1), lambda bi, si: (0, 0, 0)),
            ],
            out_specs=pl.BlockSpec((1, feats, sblk), lambda bi, si: (bi, 0, si)),
        ),
        compiler_params=pltpu.CompilerParams(
            dimension_semantics=("parallel", "parallel"),
            vmem_limit_bytes=_VMEM_LIMIT_BYTES),
    )(x3d, g3d)
    return out3d.reshape(x.shape)


# ---------------------------------------------------------------------------
# Pure-JAX reference and self-test
# ---------------------------------------------------------------------------

def _reference(x, g, *, dim=-1, stable=False):
    dtype = x.dtype
    xf = x.astype(jnp.float32)
    if stable:
        xf = xf / jnp.max(xf, axis=dim, keepdims=True)
    eps = 1e-05 if dtype == jnp.float32 else 1e-03
    mean = jnp.mean(xf, axis=dim, keepdims=True)
    var = jnp.mean((xf - mean) ** 2, axis=dim, keepdims=True)
    gshape = [1] * x.ndim
    gshape[dim % x.ndim] = x.shape[dim % x.ndim]
    gb = jnp.asarray(g, jnp.float32).reshape(gshape)
    return ((xf - mean) * jax.lax.rsqrt(var + eps) * gb).astype(dtype)


if __name__ == "__main__":
    key = jax.random.PRNGKey(0)
    k1, k2, k3, k4 = jax.random.split(key, 4)

    # 1) Lane-axis LayerNorm (dim=-1), as used in the unet's attention/FF blocks.
    batch, seq, hidden = 2, 8, 32
    x = jax.random.normal(k1, (batch, seq, hidden), dtype=jnp.float32)
    g = jnp.ones((hidden,), jnp.float32) + 0.01 * jax.random.normal(
        k2, (hidden,), jnp.float32)
    out = jax.block_until_ready(layer_norm(x, g, dim=-1, stable=False))
    ref = _reference(x, g, dim=-1, stable=False)
    assert out.shape == x.shape and out.dtype == x.dtype
    assert jnp.allclose(out, ref, atol=2e-5, rtol=2e-5), "lane-axis mismatch"

    # stable=True path (approx reciprocal on the EUP; scale cancels up to eps).
    out_s = jax.block_until_ready(layer_norm(x, g, dim=-1, stable=True))
    ref_s = _reference(x, g, dim=-1, stable=True)
    assert jnp.allclose(out_s, ref_s, atol=2e-5, rtol=2e-5), "stable mismatch"

    # 2) Channel-axis LayerNorm (dim=-3): the unet's ChanLayerNorm call pattern,
    #    handled by the dedicated sublane-reduction kernel (no moveaxis).
    b2, ch, hw = 2, 4, 16
    xc = jax.random.normal(k3, (b2, ch, hw, hw), dtype=jnp.float32)
    gc = jnp.ones((ch,), jnp.float32) + 0.01 * jax.random.normal(
        k4, (ch,), jnp.float32)
    out_c = jax.block_until_ready(layer_norm(xc, gc, dim=-3, stable=False))
    ref_c = _reference(xc, gc, dim=-3, stable=False)
    assert out_c.shape == xc.shape and out_c.dtype == xc.dtype
    assert jnp.allclose(out_c, ref_c, atol=2e-5, rtol=2e-5), "channel-axis mismatch"

    # 3) Partial last row-block (rows=15 not a multiple of the 16-row alignment).
    x3 = jax.random.normal(k1, (3, 5, 64), dtype=jnp.float32)
    g3 = jnp.ones((64,), jnp.float32)
    out_p = jax.block_until_ready(layer_norm(x3, g3, dim=-1, stable=False))
    ref_p = _reference(x3, g3, dim=-1, stable=False)
    assert jnp.allclose(out_p, ref_p, atol=2e-5, rtol=2e-5), "partial-block mismatch"

    print("KERNEL_OK")
</pallas_src>

<mosaic_0001>
module attributes {stable_mosaic.version = 11 : i64} {
  func.func @_lane_ln_kernel(%arg0: i32, %arg1: memref<16x32xf32, #tpu.memory_space<vmem>>, %arg2: memref<1x32xf32, #tpu.memory_space<vmem>>, %arg3: memref<16x32xf32, #tpu.memory_space<vmem>>) attributes {dimension_semantics = [#tpu.dimension_semantics<parallel>], iteration_bounds = array<i64: 1>, scalar_prefetch = 0 : i64, scratch_operands = 0 : i64, tpu.core_type = #tpu.core_type<tc>, window_params = [{transform_indices = @transform_0, window_bounds = array<i64: 16, 32>}, {pipeline_mode = #tpu.pipeline_mode<synchronous>, transform_indices = @transform_1, window_bounds = array<i64: 1, 32>}, {transform_indices = @transform_2, window_bounds = array<i64: 16, 32>}]} {
    %c0 = arith.constant 0 : index
    %c0_0 = arith.constant 0 : index
    %0 = vector.load %arg1[%c0, %c0_0] : memref<16x32xf32, #tpu.memory_space<vmem>>, vector<16x32xf32>
    %cst = arith.constant dense<0.000000e+00> : vector<16xf32>
    %1 = vector.multi_reduction <add>, %0, %cst [1] : vector<16x32xf32> to vector<16xf32>
    %2 = vector.shape_cast %1 : vector<16xf32> to vector<16x1xf32>
    %cst_1 = arith.constant 3.125000e-02 : f32
    %3 = vector.broadcast %cst_1 : f32 to vector<16x1xf32>
    %4 = arith.mulf %2, %3 : vector<16x1xf32>
    %5 = vector.broadcast %4 : vector<16x1xf32> to vector<16x32xf32>
    %6 = arith.subf %0, %5 : vector<16x32xf32>
    %7 = arith.mulf %6, %6 : vector<16x32xf32>
    %cst_2 = arith.constant dense<0.000000e+00> : vector<16xf32>
    %8 = vector.multi_reduction <add>, %7, %cst_2 [1] : vector<16x32xf32> to vector<16xf32>
    %9 = vector.shape_cast %8 : vector<16xf32> to vector<16x1xf32>
    %cst_3 = arith.constant 3.125000e-02 : f32
    %10 = vector.broadcast %cst_3 : f32 to vector<16x1xf32>
    %11 = arith.mulf %9, %10 : vector<16x1xf32>
    %cst_4 = arith.constant 9.99999974E-6 : f32
    %12 = vector.broadcast %cst_4 : f32 to vector<16x1xf32>
    %13 = arith.addf %11, %12 : vector<16x1xf32>
    %14 = math.rsqrt %13 : vector<16x1xf32>
    %15 = vector.broadcast %14 : vector<16x1xf32> to vector<16x32xf32>
    %16 = arith.mulf %6, %15 : vector<16x32xf32>
    %c0_5 = arith.constant 0 : index
    %c0_6 = arith.constant 0 : index
    %17 = vector.load %arg2[%c0_5, %c0_6] : memref<1x32xf32, #tpu.memory_space<vmem>>, vector<1x32xf32>
    %18 = vector.broadcast %17 : vector<1x32xf32> to vector<16x32xf32>
    %19 = arith.mulf %16, %18 : vector<16x32xf32>
    %c0_7 = arith.constant 0 : index
    %c0_8 = arith.constant 0 : index
    %20 = vector.load %arg3[%c0_7, %c0_8] : memref<16x32xf32, #tpu.memory_space<vmem>>, vector<16x32xf32>
    tpu.vector_store %arg3[%c0_7, %c0_8], %19 {strides = array<i32>} : memref<16x32xf32, #tpu.memory_space<vmem>>, vector<16x32xf32>,
    return
  }
  func.func @transform_0(%arg0: i32) -> (i32, i32) {
    %c0_i32 = arith.constant 0 : i32
    %c0_i32_0 = arith.constant 0 : i32
    return %arg0, %c0_i32 : i32, i32
  }
  func.func @transform_1(%arg0: i32) -> (i32, i32) {
    %c0_i32 = arith.constant 0 : i32
    %c0_i32_0 = arith.constant 0 : i32
    %c0_i32_1 = arith.constant 0 : i32
    return %c0_i32, %c0_i32_0 : i32, i32
  }
  func.func @transform_2(%arg0: i32) -> (i32, i32) {
    %c0_i32 = arith.constant 0 : i32
    %c0_i32_0 = arith.constant 0 : i32
    return %arg0, %c0_i32 : i32, i32
  }
}

</mosaic_0001>

<llo_original>
// kernel: tpu_custom_call.1
$region0: #{tpu_custom_call.1}
  #allocation0 [shape = 'u32[]', space=smem, size = 0x4, offset = 0x4, fixed_abs, tag = 'smem constant byte address 0x4 - core index']
  #allocation1 [shape = 'u32[144,128]{1,0:T(1,128)}', space=vmem, size = 0x12000, scoped, tag = 'internal scratch']
  %s0 = inlined_call_operand.hbm [shape: f32[16,32], index: 0, kind: input, shape index: {}]
  %s1 = inlined_call_operand.vmem [shape: f32[1,32], index: 1, kind: input, shape index: {}]
  %s2 = inlined_call_operand.hbm [shape: f32[16,32], index: 2, kind: output, shape index: {}]
  %s3 = sld [smem:[#allocation0]]
  $region22: #{tpu_custom_call.1} parent=0
    _
  %s5 = ssub.s32 1, %s3
  %s6 = scalar_select 0, %s5, %s3
  $region1: #{tpu_custom_call.1} parent=0
    #allocation2 [shape = 'u8[8192]{0}', space=vmem, size = 0x2000, scoped, tag = 'input window, operand 0, single buffered']
    #allocation3 [shape = 's32[1]{0}', space=sflag, size = 0x4, scoped, tag = 'scoped memory for tpu_custom_call.1']
    #allocation4 [shape = 's32[1]{0}', space=sflag, size = 0x4, scoped, tag = 'scoped memory for tpu_custom_call.1']
    #allocation5 [shape = 'u8[8192]{0}', space=vmem, size = 0x2000, scoped, tag = 'output window, operand 0, single buffered']
    %7 = vsyncpa [#allocation3], 0
    %8 = vsyncpa [#allocation4], 0
    // Predicated region
    $region2: #{tpu_custom_call.1} parent=1 // pred_check
      _
    $region3: #{tpu_custom_call.1} parent=1 // pred_check_branch
      %10 = sbr.rel (0) target = $region5
    $region4: #{tpu_custom_call.1} parent=1 // pred_region
      %s12 = ssub.s32 256, 256
      %13 = vsyncadd [#allocation3], %s12
      %s14 = sshll.u32 [#allocation2], 4
      %s15 = int_to_ptr.vmem [resolvable:$true] %s14
      %20 = dma.hbm_to_vmem [thread:$0]  %s0, 256, %s15, [#allocation3], 128, 128, 8
    $region5: #{tpu_custom_call.1} parent=1 // pred_fallthru
      _
    // Predicated region
    $region6: #{tpu_custom_call.1} parent=1 // pred_check
      _
    $region7: #{tpu_custom_call.1} parent=1 // pred_check_branch
      %22 = sbr.rel (0) target = $region9
    $region8: #{tpu_custom_call.1} parent=1 // pred_region
      _
    $region9: #{tpu_custom_call.1} parent=1 // pred_fallthru
      _
    // Predicated region
    $region10: #{tpu_custom_call.1} parent=1 // pred_check
      _
    $region11: #{tpu_custom_call.1} parent=1 // pred_check_branch
      %24 = sbr.rel (0) target = $region13
    $region12: #{tpu_custom_call.1} parent=1 // pred_region
      %25 = dma.done [#allocation3], 256
    $region13: #{tpu_custom_call.1} parent=1 // pred_fallthru
      _
    %v26 = vld [vmem:[#allocation2] sm:$0xff]
    %v27 = vld [vmem:[#allocation2 + $0x8] sm:$0xff]
    %vm28 = vcmask 261120
    %v29 = vsel %vm28, %v26, 0.0
    %30 = vadd.xlane.f32.xlu0 %v29
    %v31 = vpop.xlane.xlu0 %30
    %v32 = vsel %vm28, %v27, 0.0
    %33 = vadd.xlane.f32.xlu0 %v32
    %v34 = vpop.xlane.xlu0 %33
    %v35 = vmul.f32 %v31, 0.03125
    %v36 = vmul.f32 %v34, 0.03125
    %v37 = vsub.f32 %v26, %v35
    %v38 = vsub.f32 %v27, %v36
    %v39 = vmul.f32 %v37, %v37
    %v40 = vmul.f32 %v38, %v38
    %v41 = vsel %vm28, %v39, 0.0
    %42 = vadd.xlane.f32.xlu0 %v41
    %v43 = vpop.xlane.xlu0 %42
    %v44 = vsel %vm28, %v40, 0.0
    %45 = vadd.xlane.f32.xlu0 %v44
    %v46 = vpop.xlane.xlu0 %45
    %v47 = vmul.f32 %v43, 0.03125
    %v48 = vmul.f32 %v46, 0.03125
    %v49 = vadd.f32 %v47, 1e-05
    %v50 = vadd.f32 %v48, 1e-05
    %v51 = vrsqrt.pop %v49
    %v52 = vrsqrt.pop %v50
    %v53 = vmul.f32 %v37, %v51
    %v54 = vmul.f32 %v38, %v52
    %v55 = vld [vmem:[%s1] sm:$0x1]
    %v57 = vlaneseq
    %v58 = vshrl.u32 %v57, 7
    %v59 = vsub.s32 0, %v58
    %v60 = vrot.slane %v55, %v59
    %v62 = vmul.f32 %v53, %v60
    %v63 = vmul.f32 %v54, %v60
    %64 = vst.msk [vmem:[#allocation5] sm:$0xff] %vm28, %v62
    %65 = vst.msk [vmem:[#allocation5 + $0x8] sm:$0xff] %vm28, %v63
    // Predicated region
    $region14: #{tpu_custom_call.1} parent=1 // pred_check
      _
    $region15: #{tpu_custom_call.1} parent=1 // pred_check_branch
      %67 = sbr.rel (0) target = $region17
    $region16: #{tpu_custom_call.1} parent=1 // pred_region
      %s69 = ssub.s32 256, 256
      %70 = vsyncadd [#allocation4], %s69
      %s71 = sshll.u32 [#allocation5], 4
      %s72 = int_to_ptr.vmem [resolvable:$true] %s71
      %77 = dma.vmem_to_hbm [thread:$0]  %s72, 256, %s2, [#allocation4], 128, 128, 8
    $region17: #{tpu_custom_call.1} parent=1 // pred_fallthru
      _
    // Predicated region
    $region18: #{tpu_custom_call.1} parent=1 // pred_check
      _
    $region19: #{tpu_custom_call.1} parent=1 // pred_check_branch
      %79 = sbr.rel (0) target = $region21
    $region20: #{tpu_custom_call.1} parent=1 // pred_region
      %80 = dma.done [#allocation4], 256
    $region21: #{tpu_custom_call.1} parent=1 // pred_fallthru
      _
    %81 = vsyncpa [#allocation3], 1
    %82 = vsyncpa [#allocation4], 1

</llo_original>
